<compile_context>
chip_gen: v7x
topology: tpu7x:2x2x1
jax: 0.10.0
libtpu: 0.0.40
codegen_flags: <defaults>
</compile_context>

<pallas_src>
import functools

import jax
import jax.numpy as jnp
from jax.experimental import pallas as pl
from jax.experimental.pallas import tpu as pltpu


def _round_up(a, m):
    return -(-a // m) * m


def _vmem_capacity_bytes():
    try:
        return int(pltpu.get_tpu_info().vmem_capacity_bytes)
    except Exception:
        return 64 << 20   # conservative (v7x per-TensorCore VMEM)


def _onehot_kernel(x_ref, r_ref, lane_ref, o_ref, *, high_precision):
    """One grid step: one-hot encode a (bt, tile_s) slab of token ids.

    x_ref    : (bt, tile_s)    int32     token ids, native (batch, seq) layout
    r_ref    : (bt, bt*V)      bf16/f32  R[b, j] = 1.0 iff j // V == b (resident)
    lane_ref : (1, bt*V)       f32       lane % V as floats (resident)
    o_ref    : (tile_s, bt*V)  out_dtype permuted one-hot, lane-dense
    """
    x = x_ref[...].astype(r_ref.dtype)
    precision = (jax.lax.Precision.HIGHEST if high_precision
                 else jax.lax.Precision.DEFAULT)
    # MXU lane expansion: rep[t, j] = x[j // V, t]; exact small integers
    # (one-pass bf16 for ids < 256, f32/HIGHEST fallback otherwise).
    rep = jax.lax.dot_general(
        x, r_ref[...], (((0,), (0,)), ((), ())),
        preferred_element_type=jnp.float32,
        precision=precision)                                    # (tile_s, bt*V)
    # one_hot[t, j] = (x[j // V, t] == j % V); negative / >= vocab ids never
    # match any lane value in [0, V) -> all-zero row (jax.nn.one_hot semantics).
    o_ref[...] = (rep == lane_ref[...]).astype(o_ref.dtype)


def _pick_batch_tile(b, v, forced=None):
    """Batch group size bt: bt == b, or a divisor of b with bt*v % 128 == 0."""
    if forced is not None:
        bt = int(forced)
        if b % bt != 0 or (bt != b and (bt * v) % 128 != 0):
            raise ValueError(
                "batch_tile must divide batch and keep batch_tile*vocab a "
                "multiple of 128")
        return bt
    lane_cap = 8192        # lanes per output block
    r_cap = 4 << 20        # bytes for the replication matrix R
    def ok(bt):
        return bt * v <= lane_cap and bt * bt * v * 2 <= r_cap
    if ok(b):
        return b
    for bt in range(b - 1, 0, -1):
        if b % bt == 0 and (bt * v) % 128 == 0 and ok(bt):
            return bt
    # TODO(synk): pad the batch axis when no clean (bt*vocab % 128) divisor exists.
    return b


def _default_block_bytes(elt):
    cap = _vmem_capacity_bytes()
    base = (8 << 20) if cap >= (100 << 20) else (4 << 20)   # v6e: bigger blocks
    if elt <= 2:
        base = max(base, 8 << 20)   # bf16 halves the store stream; 8 MiB fits v7x
    return base


@functools.partial(
    jax.jit,
    static_argnames=("vocab_size", "out_dtype", "block_bytes", "batch_tile"))
def oh_encode(x, *, vocab_size, out_dtype=jnp.float32, block_bytes=None,
              batch_tile=None):
    """x: int array (batch, seq) -> out_dtype array (seq, batch, vocab_size).

    out_dtype=jnp.bfloat16 is the fast path: the kernel is HBM-store-bound, so
    bf16 output roughly halves wall time on v5e/v6e/v7x.
    """
    b, s = x.shape
    v = int(vocab_size)
    x = x.astype(jnp.int32)
    elt = jnp.dtype(out_dtype).itemsize

    # --- batch grouping (keeps R / intermediates bounded for large B*V) -----
    bt = _pick_batch_tile(b, v, forced=batch_tile)
    grid_b = b // bt
    bvt = bt * v
    row_bytes = bvt * elt

    # --- seq tile: sized in bytes, multiple of 128 (or the full seq) --------
    if block_bytes is None:
        block_bytes = _default_block_bytes(elt)
    t_target = max(128, (block_bytes // row_bytes) // 128 * 128)
    if t_target >= s:
        tile_s = s
        if grid_b == 1:
            # v7x: keep >= 2 grid steps so both TensorCores get work, as long
            # as each block stays >= ~512 KiB.
            half = _round_up(pl.cdiv(s, 2), 128)
            if half < s and half * row_bytes >= (512 << 10):
                tile_s = half
    else:
        tile_s = t_target
    grid_s = pl.cdiv(s, tile_s)    # last block may be partial; OOB writes dropped

    # --- loop-invariant operands, hoisted out of the kernel -----------------
    exact_bf16 = v <= 256          # ids < vocab are exact in one-pass bf16 MXU
    mat_dtype = jnp.bfloat16 if exact_bf16 else jnp.float32
    j = jnp.arange(bvt, dtype=jnp.int32)
    r_mat = (j[None, :] // v ==
             jnp.arange(bt, dtype=jnp.int32)[:, None]).astype(mat_dtype)    # (bt, bt*V)
    lane_mod = (j % v).astype(jnp.float32)[None, :]                         # (1, bt*V)

    # --- VMEM budget (double-buffered out + rep temp + inputs), 56 MiB cap --
    out_block = tile_s * bvt * elt
    rep_block = tile_s * bvt * 4
    in_block = bt * tile_s * 4
    aux = bt * bvt * jnp.dtype(mat_dtype).itemsize + bvt * 4
    vmem_need = 3 * out_block + rep_block + 2 * in_block + 2 * aux + (2 << 20)
    vmem_limit = int(min(56 << 20, max(vmem_need, 32 << 20)))

    kernel = functools.partial(_onehot_kernel, high_precision=not exact_bf16)
    x3 = x.reshape(grid_b, bt, s)   # free view; keeps block sublane dims legal

    y2d = pl.pallas_call(
        kernel,
        out_shape=jax.ShapeDtypeStruct((s, b * v), out_dtype),
        grid_spec=pltpu.PrefetchScalarGridSpec(
            num_scalar_prefetch=0,
            grid=(grid_b, grid_s),
            in_specs=[
                pl.BlockSpec((None, bt, tile_s), lambda bi, si: (bi, 0, si)),
                pl.BlockSpec((bt, bvt), lambda bi, si: (0, 0)),     # resident R
                pl.BlockSpec((1, bvt), lambda bi, si: (0, 0)),      # resident lane%V
            ],
            out_specs=pl.BlockSpec((tile_s, bvt), lambda bi, si: (si, bi)),
        ),
        compiler_params=pltpu.CompilerParams(
            dimension_semantics=("parallel", "parallel"),
            vmem_limit_bytes=vmem_limit),
        cost_estimate=pl.CostEstimate(
            flops=2 * s * b * bt * v,
            transcendentals=0,
            bytes_accessed=b * s * 4 + s * b * v * elt),
    )(x3, r_mat, lane_mod)

    # Free row-major view: (seq, B*V) -> (seq, B, V).  No data movement.
    return y2d.reshape(s, b, v)


class OHEncoder:
    """JAX/Pallas port of the PyTorch OHEncoder module (no learnable params).

    out_dtype defaults to float32 to match torch's `.float()`; pass
    out_dtype=jnp.bfloat16 for the ~2x faster (HBM-store-bound) path.
    """

    def __init__(self, vocab_size, return_tuple=False, out_dtype=jnp.float32):
        self.vocab_size = vocab_size
        self.return_tuple = return_tuple
        self.out_dtype = out_dtype

    def __call__(self, inp):
        is_list = False
        if isinstance(inp, (tuple, set, list)):
            x = list(inp)[0]
            is_list = True
        else:
            x = inp
        y = oh_encode(x, vocab_size=self.vocab_size, out_dtype=self.out_dtype)
        if self.return_tuple:
            inp = list(inp) if is_list else [None]
            inp[0] = y
            return inp
        return y


def _reference(x, vocab):
    return jnp.transpose(jax.nn.one_hot(x, vocab, dtype=jnp.float32), (1, 0, 2))


if __name__ == "__main__":
    key = jax.random.PRNGKey(0)

    # Primary small test (module-typical shapes), float32 output (torch match).
    batch, seq, vocab = 2, 16, 32
    x = jax.random.randint(key, (batch, seq), minval=0, maxval=vocab,
                           dtype=jnp.int32)
    enc = OHEncoder(vocab_size=vocab, return_tuple=False)
    y = jax.block_until_ready(enc(x))
    ref = _reference(x, vocab)
    assert y.shape == (seq, batch, vocab)
    assert y.dtype == jnp.float32
    assert bool(jnp.all(y == ref))

    # bf16 fast path (halves the HBM store stream).
    y_bf = jax.block_until_ready(
        oh_encode(x, vocab_size=vocab, out_dtype=jnp.bfloat16))
    assert y_bf.dtype == jnp.bfloat16
    assert bool(jnp.all(y_bf.astype(jnp.float32) == ref))

    # Multi-step grid with a partial last block (seq=200, tile_s=128), plus
    # negative / out-of-range ids (must give all-zero rows like jax.nn.one_hot).
    b2, s2, v2 = 2, 200, 32
    x2 = jax.random.randint(jax.random.PRNGKey(1), (b2, s2), minval=0,
                            maxval=v2, dtype=jnp.int32)
    x2 = x2.at[0, 0].set(-1).at[1, 3].set(v2)
    y2 = jax.block_until_ready(
        oh_encode(x2, vocab_size=v2, block_bytes=32 * 1024))
    assert y2.shape == (s2, b2, v2)
    assert bool(jnp.all(y2 == _reference(x2, v2)))

    # Batch-tiled path: 2 batch groups of 4, each output block 128 lanes wide.
    b3, s3, v3 = 8, 64, 32
    x3 = jax.random.randint(jax.random.PRNGKey(2), (b3, s3), minval=0,
                            maxval=v3, dtype=jnp.int32)
    y3 = jax.block_until_ready(oh_encode(x3, vocab_size=v3, batch_tile=4))
    assert y3.shape == (s3, b3, v3)
    assert bool(jnp.all(y3 == _reference(x3, v3)))

    print("KERNEL_OK")
</pallas_src>

<mosaic_0001>
module attributes {stable_mosaic.version = 11 : i64} {
  func.func @_onehot_kernel(%arg0: i32, %arg1: i32, %arg2: memref<1x2x16xi32, #tpu.memory_space<vmem>>, %arg3: memref<2x64xbf16, #tpu.memory_space<vmem>>, %arg4: memref<1x64xf32, #tpu.memory_space<vmem>>, %arg5: memref<16x64xf32, #tpu.memory_space<vmem>>) attributes {dimension_semantics = [#tpu.dimension_semantics<parallel>, #tpu.dimension_semantics<parallel>], iteration_bounds = array<i64: 1, 1>, scalar_prefetch = 0 : i64, scratch_operands = 0 : i64, tpu.core_type = #tpu.core_type<tc>, window_params = [{transform_indices = @transform_0, window_bounds = array<i64: 1, 2, 16>}, {pipeline_mode = #tpu.pipeline_mode<synchronous>, transform_indices = @transform_1, window_bounds = array<i64: 2, 64>}, {pipeline_mode = #tpu.pipeline_mode<synchronous>, transform_indices = @transform_2, window_bounds = array<i64: 1, 64>}, {transform_indices = @transform_3, window_bounds = array<i64: 16, 64>}]} {
    %c0 = arith.constant 0 : index
    %c0_0 = arith.constant 0 : index
    %c0_1 = arith.constant 0 : index
    %0 = vector.load %arg2[%c0, %c0_0, %c0_1] : memref<1x2x16xi32, #tpu.memory_space<vmem>>, vector<1x2x16xi32>
    %1 = vector.shape_cast %0 : vector<1x2x16xi32> to vector<2x16xi32>
    %2 = arith.sitofp %1 : vector<2x16xi32> to vector<2x16xbf16>
    %c0_2 = arith.constant 0 : index
    %c0_3 = arith.constant 0 : index
    %3 = vector.load %arg3[%c0_2, %c0_3] : memref<2x64xbf16, #tpu.memory_space<vmem>>, vector<2x64xbf16>
    %cst = arith.constant dense<0.000000e+00> : vector<16x64xf32>
    %4 = tpu.matmul %2, %3, %cst {dimension_numbers = #tpu.dot_dimension_numbers<[0], [0], [1], [1], [0, 1, 1, 1], [], []>} : vector<2x16xbf16>, vector<2x64xbf16>, vector<16x64xf32> -> vector<16x64xf32>
    %c0_4 = arith.constant 0 : index
    %c0_5 = arith.constant 0 : index
    %5 = vector.load %arg4[%c0_4, %c0_5] : memref<1x64xf32, #tpu.memory_space<vmem>>, vector<1x64xf32>
    %6 = vector.broadcast %5 : vector<1x64xf32> to vector<16x64xf32>
    %7 = arith.cmpf oeq, %4, %6 : vector<16x64xf32>
    %8 = arith.extui %7 : vector<16x64xi1> to vector<16x64xi32>
    %9 = arith.sitofp %8 : vector<16x64xi32> to vector<16x64xf32>
    %c0_6 = arith.constant 0 : index
    %c0_7 = arith.constant 0 : index
    %10 = vector.load %arg5[%c0_6, %c0_7] : memref<16x64xf32, #tpu.memory_space<vmem>>, vector<16x64xf32>
    tpu.vector_store %arg5[%c0_6, %c0_7], %9 {strides = array<i32>} : memref<16x64xf32, #tpu.memory_space<vmem>>, vector<16x64xf32>,
    return
  }
  func.func @transform_0(%arg0: i32, %arg1: i32) -> (i32, i32, i32) {
    %c0_i32 = arith.constant 0 : i32
    %c0_i32_0 = arith.constant 0 : i32
    return %arg0, %c0_i32, %arg1 : i32, i32, i32
  }
  func.func @transform_1(%arg0: i32, %arg1: i32) -> (i32, i32) {
    %c0_i32 = arith.constant 0 : i32
    %c0_i32_0 = arith.constant 0 : i32
    %c0_i32_1 = arith.constant 0 : i32
    return %c0_i32, %c0_i32_0 : i32, i32
  }
  func.func @transform_2(%arg0: i32, %arg1: i32) -> (i32, i32) {
    %c0_i32 = arith.constant 0 : i32
    %c0_i32_0 = arith.constant 0 : i32
    %c0_i32_1 = arith.constant 0 : i32
    return %c0_i32, %c0_i32_0 : i32, i32
  }
  func.func @transform_3(%arg0: i32, %arg1: i32) -> (i32, i32) {
    %c0_i32 = arith.constant 0 : i32
    return %arg1, %arg0 : i32, i32
  }
}

</mosaic_0001>

<llo_original>
// kernel: oh_encode.1
$region0: #{oh_encode.1}
  #allocation0 [shape = 'u32[]', space=smem, size = 0x4, offset = 0x4, fixed_abs, tag = 'smem constant byte address 0x4 - core index']
  #allocation1 [shape = 'u32[144,128]{1,0:T(1,128)}', space=vmem, size = 0x12000, scoped, tag = 'internal scratch']
  %s0 = inlined_call_operand.vmem [shape: s32[1,2,16], index: 0, kind: input, shape index: {}]
  %s1 = inlined_call_operand.vmem [shape: bf16[2,64], index: 1, kind: input, shape index: {}]
  %s2 = inlined_call_operand.vmem [shape: f32[1,64], index: 2, kind: input, shape index: {}]
  %s3 = inlined_call_operand.vmem [shape: f32[16,64], index: 3, kind: output, shape index: {}]
  %s4 = sld [smem:[#allocation0]]
  $region22: #{oh_encode.1} parent=0
    _
  %s6 = ssub.s32 1, %s4
  %s7 = scalar_select 0, %s6, %s4
  // Predicated region
  $region2: #{oh_encode.1} parent=0 // pred_check
    _
  $region3: #{oh_encode.1} parent=0 // pred_check_branch
    %9 = sbr.rel (0) target = $region5
  $region4: #{oh_encode.1} parent=0 // pred_region
    _
  $region5: #{oh_encode.1} parent=0 // pred_fallthru
    _
  // Predicated region
  $region6: #{oh_encode.1} parent=0 // pred_check
    _
  $region7: #{oh_encode.1} parent=0 // pred_check_branch
    %11 = sbr.rel (0) target = $region9
  $region8: #{oh_encode.1} parent=0 // pred_region
    _
  $region9: #{oh_encode.1} parent=0 // pred_fallthru
    _
  // Predicated region
  $region10: #{oh_encode.1} parent=0 // pred_check
    _
  $region11: #{oh_encode.1} parent=0 // pred_check_branch
    %13 = sbr.rel (0) target = $region13
  $region12: #{oh_encode.1} parent=0 // pred_region
    _
  $region13: #{oh_encode.1} parent=0 // pred_fallthru
    _
  %v15 = vld [vmem:[%s0] sm:$0x3]
  %v16 = vcvt.s32.f32 %v15
  %v17 = vpack.c.bf16 %v16, %v16
  %v18 = vld [vmem:[%s1] sm:$0x1]
  %19 = vxpose.xlu0.c.b16.start [1/8] %v17, 128
  %20 = vxpose.xlu0.c.b16.cont [2/8] 0, 128
  %21 = vxpose.xlu0.c.b16.cont [3/8] 0, 128
  %22 = vxpose.xlu0.c.b16.cont [4/8] 0, 128
  %23 = vxpose.xlu0.c.b16.cont [5/8] 0, 128
  %24 = vxpose.xlu0.c.b16.cont [6/8] 0, 128
  %25 = vxpose.xlu0.c.b16.cont [7/8] 0, 128
  %26 = vxpose.xlu0.c.b16.end [8/8] 0, 128
  %v27 = vpop.trf.xlu0
  %v28 = vpop.trf.xlu0
  %v29 = vpop.trf.xlu0
  %v30 = vpop.trf.xlu0
  %v31 = vpop.trf.xlu0
  %v32 = vpop.trf.xlu0
  %v33 = vpop.trf.xlu0
  %v34 = vpop.trf.xlu0
  %vm35 = vcmask 15360
  %v37 = vsel %vm35, %v27, 0
  %vm39 = vcmask 1040384
  %v41 = vsel %vm39, %v18, 0
  %43 = vmatprep.subr.bf16.mxu0 0
  %44 = vmatpush1.bf16.msra.mxu0 %v41
  %45 = vmatprep.subr.bf16.mxu0 0
  %46 = vmatpush1.bf16.msra.mxu0 0
  %47 = vmatprep.subr.bf16.mxu0 0
  %48 = vmatpush1.bf16.msra.mxu0 0
  %49 = vmatprep.subr.bf16.mxu0 0
  %50 = vmatpush1.bf16.msra.mxu0 0
  %51 = vmatprep.subr.bf16.mxu0 0
  %52 = vmatpush1.bf16.msra.mxu0 0
  %53 = vmatprep.subr.bf16.mxu0 0
  %54 = vmatpush1.bf16.msra.mxu0 0
  %55 = vmatprep.subr.bf16.mxu0 0
  %56 = vmatpush1.bf16.msra.mxu0 0
  %57 = vmatprep.subr.bf16.mxu0 0
  %58 = vmatpush1.bf16.msra.mxu0 0
  %59 = vmatprep.subr.bf16.mxu0 0
  %60 = vmatpush1.bf16.msra.mxu0 0
  %61 = vmatprep.subr.bf16.mxu0 0
  %62 = vmatpush1.bf16.msra.mxu0 0
  %63 = vmatprep.subr.bf16.mxu0 0
  %64 = vmatpush1.bf16.msra.mxu0 0
  %65 = vmatprep.subr.bf16.mxu0 0
  %66 = vmatpush1.bf16.msra.mxu0 0
  %67 = vmatprep.subr.bf16.mxu0 0
  %68 = vmatpush1.bf16.msra.mxu0 0
  %69 = vmatprep.subr.bf16.mxu0 0
  %70 = vmatpush1.bf16.msra.mxu0 0
  %71 = vmatprep.subr.bf16.mxu0 0
  %72 = vmatpush1.bf16.msra.mxu0 0
  %73 = vmatprep.subr.bf16.mxu0 0
  %74 = vmatpush1.bf16.msra.mxu0 0
  %75 = vmatprep.mubr.bf16.mxu0 0
  %76 = vmatmul.mubr.bf16.gmra.mrb[0].mxu0 %v37
  %v77 = vpop.f32.mrb[0].mxu0
  %v78 = vadd.f32 0.0, %v77
  %v79 = vpop.f32.mrb[0].mxu0
  %v80 = vpop.f32.mrb[0].mxu0
  %v81 = vadd.f32 0.0, %v80
  %v82 = vpop.f32.mrb[0].mxu0
  %83 = vdwg.mxu0
  %v84 = vld [vmem:[%s2] sm:$0x1]
  %v86 = vlaneseq
  %v87 = vshrl.u32 %v86, 7
  %v88 = vsub.s32 0, %v87
  %v89 = vrot.slane %v84, %v88
  %vm91 = vcmp.eq.f32.partialorder %v78, %v89
  %vm92 = vcmp.eq.f32.partialorder %v81, %v89
  %v93 = vsel %vm91, 1, 0
  %v94 = vsel %vm92, 1, 0
  %v95 = vcvt.s32.f32 %v93
  %v96 = vcvt.s32.f32 %v94
  %vm97 = vcmask 523264
  %98 = vst.msk [vmem:[%s3] sm:$0xff] %vm97, %v95
  %99 = vst.msk [vmem:[%s3 + $0x8] sm:$0xff] %vm97, %v96
  // Predicated region
  $region14: #{oh_encode.1} parent=0 // pred_check
    _
  $region15: #{oh_encode.1} parent=0 // pred_check_branch
    %101 = sbr.rel (0) target = $region17
  $region16: #{oh_encode.1} parent=0 // pred_region
    _
  $region17: #{oh_encode.1} parent=0 // pred_fallthru
    _
  // Predicated region
  $region18: #{oh_encode.1} parent=0 // pred_check
    _
  $region19: #{oh_encode.1} parent=0 // pred_check_branch
    %103 = sbr.rel (0) target = $region21
  $region20: #{oh_encode.1} parent=0 // pred_region
    _
  $region21: #{oh_encode.1} parent=0 // pred_fallthru
    _

</llo_original>
